<compile_context>
chip_gen: v7x
topology: tpu7x:2x2x1
jax: 0.10.0
libtpu: 0.0.40
codegen_flags: <defaults>
</compile_context>

<pallas_src>
import functools

import jax
import jax.numpy as jnp
from jax.experimental import pallas as pl
from jax.experimental.pallas import tpu as pltpu


# ----------------------------- Pallas kernel ------------------------------ #

def _conv_mm_kernel(p_ref, w_ref, b_ref, o_ref, *, apply_swish):
    """Fused im2col-matmul (bf16 -> f32 acc) + bias + optional Swish."""
    acc = jnp.dot(p_ref[...], w_ref[...], preferred_element_type=jnp.float32)
    acc = acc + b_ref[...]                       # bias broadcast over rows
    if apply_swish:
        acc = acc * jax.nn.sigmoid(acc)          # Swish: x * sigmoid(x)
    o_ref[...] = acc.astype(o_ref.dtype)


def _round_up(x, m):
    return ((x + m - 1) // m) * m


def _choose_m_tiling(m):
    """Pick an M tile (multiple of 16 for bf16 sublane packing)."""
    tm_max = 512
    m16 = _round_up(m, 16)
    if m16 >= 2 * tm_max:
        tm = tm_max
    elif m16 >= 32:
        tm = _round_up(m16 // 2, 16)             # >= 2 tiles -> v7x megacore
    else:
        tm = m16
    return tm, _round_up(m16, tm)


def conv_mm_pallas(patches, w_mat, bias, apply_swish):
    """patches: (M, K), w_mat: (K, N), bias: (N,) -> (M, N) f32."""
    m, k = patches.shape
    n = w_mat.shape[1]

    k_pad = _round_up(k, 128)                    # aligned MXU contraction
    n_pad = _round_up(n, 128)                    # lane-dense output stores
    tm, m_pad = _choose_m_tiling(m)
    grid_m = m_pad // tm

    p = jnp.pad(patches.astype(jnp.bfloat16), ((0, m_pad - m), (0, k_pad - k)))
    w = jnp.pad(w_mat.astype(jnp.bfloat16), ((0, k_pad - k), (0, n_pad - n)))
    b = jnp.pad(bias.astype(jnp.float32), (0, n_pad - n)).reshape(1, n_pad)

    kern = functools.partial(_conv_mm_kernel, apply_swish=apply_swish)
    cost = pl.CostEstimate(
        flops=2 * m_pad * k_pad * n_pad,
        transcendentals=m_pad * n_pad if apply_swish else 0,
        bytes_accessed=(m_pad * k_pad * 2 + k_pad * n_pad * 2
                        + n_pad * 4 + m_pad * n_pad * 4),
    )

    out = pl.pallas_call(
        kern,
        out_shape=jax.ShapeDtypeStruct((m_pad, n_pad), jnp.float32),
        grid=(grid_m,),
        in_specs=[
            pl.BlockSpec((tm, k_pad), lambda i: (i, 0)),      # streamed tiles
            pl.BlockSpec((k_pad, n_pad), lambda i: (0, 0)),   # VMEM-resident
            pl.BlockSpec((1, n_pad), lambda i: (0, 0)),       # VMEM-resident
        ],
        out_specs=pl.BlockSpec((tm, n_pad), lambda i: (i, 0)),
        compiler_params=pltpu.CompilerParams(
            dimension_semantics=("parallel",),
            vmem_limit_bytes=64 * 1024 * 1024,
        ),
        cost_estimate=cost,
    )(p, w, b)
    return out[:m, :n]


# ------------------------------- JAX glue --------------------------------- #

def im2col(x_nhwc, kh, kw, stride, pad):
    """Extract conv patches. Returns ((N*Ho*Wo, kh*kw*C), Ho, Wo)."""
    n, h, w, c = x_nhwc.shape
    xp = jnp.pad(x_nhwc, ((0, 0), (pad, pad), (pad, pad), (0, 0)))
    ho = (h + 2 * pad - kh) // stride + 1
    wo = (w + 2 * pad - kw) // stride + 1
    cols = []
    for i in range(kh):
        for j in range(kw):
            cols.append(xp[:, i:i + stride * ho:stride,
                           j:j + stride * wo:stride, :])
    patches = jnp.stack(cols, axis=3)            # (n, ho, wo, kh*kw, c)
    return patches.reshape(n * ho * wo, kh * kw * c), ho, wo


def spectral_normalize(w, u, n_iter=1, eps=1e-12):
    """Emulates torch.nn.utils.spectral_norm (one power iteration)."""
    c_out = w.shape[0]
    w_mat = w.reshape(c_out, -1)

    def l2n(v):
        return v / (jnp.linalg.norm(v) + eps)

    v = None
    for _ in range(n_iter):
        v = l2n(w_mat.T @ u)
        u = l2n(w_mat @ v)
    sigma = u @ (w_mat @ v)
    return w / sigma


def make_params(key, input_nc=3, ndf=16, n_layers=3):
    """Deterministic synthetic params matching the PyTorch module's shapes."""
    kw_ = 4
    chans = [input_nc, ndf]
    strides = [2]
    for n in range(1, n_layers):
        chans.append(ndf * min(2 ** n, 8))
        strides.append(2)
    chans.append(ndf * min(2 ** n_layers, 8))
    strides.append(1)
    chans.append(1)
    strides.append(1)

    params = []
    for li, stride in enumerate(strides):
        cin, cout = chans[li], chans[li + 1]
        key, kw_key, kb_key, ku_key = jax.random.split(key, 4)
        w = 0.05 * jax.random.normal(kw_key, (cout, cin, kw_, kw_), jnp.float32)
        b = 0.01 * jax.random.normal(kb_key, (cout,), jnp.float32)
        u = jax.random.normal(ku_key, (cout,), jnp.float32)
        u = u / (jnp.linalg.norm(u) + 1e-12)
        w_sn = spectral_normalize(w, u)          # weight seen by forward()
        params.append((w_sn, b, stride))
    return params


def discriminator_forward(x_nchw, params):
    """Forward pass; input/output are NCHW like the PyTorch module."""
    x = jnp.transpose(x_nchw, (0, 2, 3, 1)).astype(jnp.float32)   # -> NHWC
    n_total = len(params)
    for idx, (w, b, stride) in enumerate(params):
        cout, cin, kh, kw_ = w.shape
        # bf16 activations into im2col (halves patch HBM traffic).
        patches, ho, wo = im2col(x.astype(jnp.bfloat16), kh, kw_, stride, pad=1)
        # (C_out, C_in, kh, kw) -> (kh, kw, C_in, C_out) -> (K, C_out);
        # matches patch flattening order (pos-major, channel-minor).
        w_mat = jnp.transpose(w, (2, 3, 1, 0)).reshape(kh * kw_ * cin, cout)
        apply_swish = idx < n_total - 1          # last conv has no activation
        out = conv_mm_pallas(patches, w_mat, b, apply_swish)
        x = out.reshape(x.shape[0], ho, wo, cout)
    return jnp.transpose(x, (0, 3, 1, 2))        # -> NCHW


def reference_forward(x_nchw, params):
    """Pure-JAX reference (lax.conv, same bf16-in / f32-acc precision)."""
    x = x_nchw.astype(jnp.float32)
    for idx, (w, b, stride) in enumerate(params):
        y = jax.lax.conv_general_dilated(
            x.astype(jnp.bfloat16), w.astype(jnp.bfloat16),
            window_strides=(stride, stride),
            padding=((1, 1), (1, 1)),
            dimension_numbers=("NCHW", "OIHW", "NCHW"),
            preferred_element_type=jnp.float32)
        y = y + b.reshape(1, -1, 1, 1)
        if idx < len(params) - 1:
            y = y * jax.nn.sigmoid(y)
        x = y
    return x


# --------------------------------- main ------------------------------------ #

if __name__ == "__main__":
    key = jax.random.PRNGKey(0)
    key, xkey, pkey = jax.random.split(key, 3)

    # Small shapes: batch=2, input_nc=3, spatial=32 (so the final stride-1
    # convs still produce a >=1 spatial output), ndf=16, n_layers=3.
    x = jax.random.normal(xkey, (2, 3, 32, 32), jnp.float32)
    params = make_params(pkey, input_nc=3, ndf=16, n_layers=3)

    out = discriminator_forward(x, params)
    out = jax.block_until_ready(out)

    ref = jax.block_until_ready(reference_forward(x, params))
    assert out.shape == ref.shape, (out.shape, ref.shape)
    assert jnp.allclose(out, ref, atol=1e-2, rtol=1e-2), "mismatch vs reference"

    print("KERNEL_OK")
</pallas_src>

<mosaic_0001>
module attributes {stable_mosaic.version = 11 : i64} {
  func.func @_conv_mm_kernel(%arg0: i32, %arg1: memref<256x128xbf16, #tpu.memory_space<vmem>>, %arg2: memref<128x128xbf16, #tpu.memory_space<vmem>>, %arg3: memref<1x128xf32, #tpu.memory_space<vmem>>, %arg4: memref<256x128xf32, #tpu.memory_space<vmem>>) attributes {dimension_semantics = [#tpu.dimension_semantics<parallel>], iteration_bounds = array<i64: 2>, scalar_prefetch = 0 : i64, scratch_operands = 0 : i64, tpu.core_type = #tpu.core_type<tc>, window_params = [{transform_indices = @transform_0, window_bounds = array<i64: 256, 128>}, {pipeline_mode = #tpu.pipeline_mode<synchronous>, transform_indices = @transform_1, window_bounds = array<i64: 128, 128>}, {pipeline_mode = #tpu.pipeline_mode<synchronous>, transform_indices = @transform_2, window_bounds = array<i64: 1, 128>}, {transform_indices = @transform_3, window_bounds = array<i64: 256, 128>}]} {
    %c0 = arith.constant 0 : index
    %c0_0 = arith.constant 0 : index
    %0 = vector.load %arg1[%c0, %c0_0] : memref<256x128xbf16, #tpu.memory_space<vmem>>, vector<256x128xbf16>
    %c0_1 = arith.constant 0 : index
    %c0_2 = arith.constant 0 : index
    %1 = vector.load %arg2[%c0_1, %c0_2] : memref<128x128xbf16, #tpu.memory_space<vmem>>, vector<128x128xbf16>
    %cst = arith.constant dense<0.000000e+00> : vector<256x128xf32>
    %2 = tpu.matmul %0, %1, %cst {dimension_numbers = #tpu.dot_dimension_numbers<[1], [0], [0], [1], [0, 0, 1, 1], [], []>} : vector<256x128xbf16>, vector<128x128xbf16>, vector<256x128xf32> -> vector<256x128xf32>
    %c0_3 = arith.constant 0 : index
    %c0_4 = arith.constant 0 : index
    %3 = vector.load %arg3[%c0_3, %c0_4] : memref<1x128xf32, #tpu.memory_space<vmem>>, vector<1x128xf32>
    %4 = vector.broadcast %3 : vector<1x128xf32> to vector<256x128xf32>
    %5 = arith.addf %2, %4 : vector<256x128xf32>
    %6 = arith.negf %5 : vector<256x128xf32>
    %7 = math.exp %6 : vector<256x128xf32>
    %cst_5 = arith.constant 1.000000e+00 : f32
    %8 = vector.broadcast %cst_5 : f32 to vector<256x128xf32>
    %9 = arith.addf %8, %7 : vector<256x128xf32>
    %10 = arith.divf %8, %9 : vector<256x128xf32>
    %11 = arith.mulf %5, %10 : vector<256x128xf32>
    %c0_6 = arith.constant 0 : index
    %c0_7 = arith.constant 0 : index
    %12 = vector.load %arg4[%c0_6, %c0_7] : memref<256x128xf32, #tpu.memory_space<vmem>>, vector<256x128xf32>
    tpu.vector_store %arg4[%c0_6, %c0_7], %11 {strides = array<i32>} : memref<256x128xf32, #tpu.memory_space<vmem>>, vector<256x128xf32>,
    return
  }
  func.func @transform_0(%arg0: i32) -> (i32, i32) {
    %c0_i32 = arith.constant 0 : i32
    %c0_i32_0 = arith.constant 0 : i32
    return %arg0, %c0_i32 : i32, i32
  }
  func.func @transform_1(%arg0: i32) -> (i32, i32) {
    %c0_i32 = arith.constant 0 : i32
    %c0_i32_0 = arith.constant 0 : i32
    %c0_i32_1 = arith.constant 0 : i32
    return %c0_i32, %c0_i32_0 : i32, i32
  }
  func.func @transform_2(%arg0: i32) -> (i32, i32) {
    %c0_i32 = arith.constant 0 : i32
    %c0_i32_0 = arith.constant 0 : i32
    %c0_i32_1 = arith.constant 0 : i32
    return %c0_i32, %c0_i32_0 : i32, i32
  }
  func.func @transform_3(%arg0: i32) -> (i32, i32) {
    %c0_i32 = arith.constant 0 : i32
    %c0_i32_0 = arith.constant 0 : i32
    return %arg0, %c0_i32 : i32, i32
  }
}

</mosaic_0001>

<llo_original>
// kernel: tpu_custom_call.1
$region0: #{tpu_custom_call.1}
  #allocation0 [shape = 'u32[]', space=smem, size = 0x4, offset = 0x4, fixed_abs, tag = 'smem constant byte address 0x4 - core index']
  #allocation1 [shape = 'u32[144,128]{1,0:T(1,128)}', space=vmem, size = 0x12000, scoped, tag = 'internal scratch']
  %s0 = inlined_call_operand.hbm [shape: bf16[512,128], index: 0, kind: input, shape index: {}]
  %s1 = inlined_call_operand.hbm [shape: bf16[128,128], index: 1, kind: input, shape index: {}]
  %s2 = inlined_call_operand.hbm [shape: f32[1,128], index: 2, kind: input, shape index: {}]
  %s3 = inlined_call_operand.hbm [shape: f32[512,128], index: 3, kind: output, shape index: {}]
  %s4 = sld [smem:[#allocation0]]
  $region57: #{tpu_custom_call.1} parent=0
    _
  %s6 = ssub.s32 1, %s4
  %s7 = scalar_select 0, %s6, %s4
  $region1: #{tpu_custom_call.1} parent=0
    #allocation2 [shape = 'u8[131072]{0}', space=vmem, size = 0x20000, scoped, tag = 'input window, operand 0']
    #allocation3 [shape = 's32[2]{0}', space=sflag, size = 0x8, scoped, tag = 'scoped memory for tpu_custom_call.1']
    #allocation4 [shape = 's32[2]{0}', space=sflag, size = 0x8, scoped, tag = 'scoped memory for tpu_custom_call.1']
    #allocation5 [shape = 'u8[32768]{0}', space=vmem, size = 0x8000, scoped, tag = 'input window, operand 1, single buffered']
    #allocation6 [shape = 's32[1]{0}', space=sflag, size = 0x4, scoped, tag = 'scoped memory for tpu_custom_call.1']
    #allocation7 [shape = 'u8[512]{0}', space=vmem, size = 0x400, scoped, tag = 'input window, operand 2, single buffered']
    #allocation8 [shape = 'u8[262144]{0}', space=vmem, size = 0x40000, scoped, tag = 'output window, operand 0']
    %8 = vsyncpa [#allocation3], 0
    %s9 = scalar_lea.sflag [#allocation3], 1
    %10 = vsyncpa %s9, 0
    %11 = vsyncpa [#allocation6], 0
    %12 = vsyncpa [#allocation4], 0
    %s13 = scalar_lea.sflag [#allocation4], 1
    %14 = vsyncpa %s13, 0
    loop: start=0, step=1, limit=4
    $region2: #{tpu_custom_call.1} parent=1 // loop_pre_header
      _
    $region3: #{tpu_custom_call.1} parent=1 // loop_header
      %s16 = sphi 0, %s20
      %p17 = scmp.ge.s32.totalorder %s16, 4
      %s26 = sphi 0, %s28
      %s29 = sphi 0, %s26
      %s30 = sphi 0, %s29
      %s46 = sphi 0, %s30
      %s50 = sphi 0, %s50
      %s52 = sphi 0, %s50
      %s53 = sphi 0, %s52
      %s67 = sphi 0, %s53
      %s71 = sphi 0, %s71
      %s73 = sphi 0, %s71
      %s74 = sphi 0, %s73
      %s88 = sphi 0, %s74
      %s94 = sphi 0, %s96
      %s97 = sphi 0, %s94
      %s98 = sphi 0, %s97
      %s114 = sphi 0, %s98
    $region4: #{tpu_custom_call.1} parent=1 // loop_header_branch
      %19 = sbr.rel (%p17) target = $region8
    $region5: #{tpu_custom_call.1} parent=1 // loop_body
      %s21 = ssub.s32 %s16, 1
      %s22 = ssub.s32 %s16, 2
      %s23 = sadd.s32 %s16, 1
      %s24 = ssub.s32 %s16, %s23
      %p25 = scmp.eq.s32.totalorder %s24, 0
      %s27 = sadd.s32 %s26, 1
      %s28 = scalar_select %p25, %s26, %s27
      %p31 = pneg %p25
      %p32 = scmp.eq.s32.totalorder %s16, 1
      %p33 = por %p31, %p32
      %p34 = scmp.ne.s32.totalorder %s26, %s29
      %p35 = scmp.eq.s32.totalorder %s16, 0
      %p36 = por %p34, %p35
      %p37 = scmp.ne.s32.totalorder %s26, %s29
      %p38 = scmp.eq.s32.totalorder %s21, 1
      %p39 = por %p37, %p38
      %p40 = scmp.ne.s32.totalorder %s29, %s30
      %p41 = scmp.eq.s32.totalorder %s21, 0
      %p42 = por %p40, %p41
      %p43 = scmp.ne.s32.totalorder %s29, %s30
      %p44 = scmp.eq.s32.totalorder %s22, 1
      %p45 = por %p43, %p44
      %p47 = scmp.ne.s32.totalorder %s30, %s46
      %p48 = scmp.eq.s32.totalorder %s22, 0
      %p49 = por %p47, %p48
      %s51 = sadd.s32 %s50, 1
      %p54 = scmp.eq.s32.totalorder %s16, 1
      %p55 = scmp.ne.s32.totalorder %s50, %s52
      %p56 = scmp.eq.s32.totalorder %s16, 0
      %p57 = por %p55, %p56
      %p58 = scmp.ne.s32.totalorder %s50, %s52
      %p59 = scmp.eq.s32.totalorder %s21, 1
      %p60 = por %p58, %p59
      %p61 = scmp.ne.s32.totalorder %s52, %s53
      %p62 = scmp.eq.s32.totalorder %s21, 0
      %p63 = por %p61, %p62
      %p64 = scmp.ne.s32.totalorder %s52, %s53
      %p65 = scmp.eq.s32.totalorder %s22, 1
      %p66 = por %p64, %p65
      %p68 = scmp.ne.s32.totalorder %s53, %s67
      %p69 = scmp.eq.s32.totalorder %s22, 0
      %p70 = por %p68, %p69
      %s72 = sadd.s32 %s71, 1
      %p75 = scmp.eq.s32.totalorder %s16, 1
      %p76 = scmp.ne.s32.totalorder %s71, %s73
      %p77 = scmp.eq.s32.totalorder %s16, 0
      %p78 = por %p76, %p77
      %p79 = scmp.ne.s32.totalorder %s71, %s73
      %p80 = scmp.eq.s32.totalorder %s21, 1
      %p81 = por %p79, %p80
      %p82 = scmp.ne.s32.totalorder %s73, %s74
      %p83 = scmp.eq.s32.totalorder %s21, 0
      %p84 = por %p82, %p83
      %p85 = scmp.ne.s32.totalorder %s73, %s74
      %p86 = scmp.eq.s32.totalorder %s22, 1
      %p87 = por %p85, %p86
      %p89 = scmp.ne.s32.totalorder %s74, %s88
      %p90 = scmp.eq.s32.totalorder %s22, 0
      %p91 = por %p89, %p90
      %s92 = ssub.s32 %s16, %s23
      %p93 = scmp.eq.s32.totalorder %s92, 0
      %s95 = sadd.s32 %s94, 1
      %s96 = scalar_select %p93, %s94, %s95
      %p99 = pneg %p93
      %p100 = scmp.eq.s32.totalorder %s16, 1
      %p101 = por %p99, %p100
      %p102 = scmp.ne.s32.totalorder %s94, %s97
      %p103 = scmp.eq.s32.totalorder %s16, 0
      %p104 = por %p102, %p103
      %p105 = scmp.ne.s32.totalorder %s94, %s97
      %p106 = scmp.eq.s32.totalorder %s21, 1
      %p107 = por %p105, %p106
      %p108 = scmp.ne.s32.totalorder %s97, %s98
      %p109 = scmp.eq.s32.totalorder %s21, 0
      %p110 = por %p108, %p109
      %p111 = scmp.ne.s32.totalorder %s97, %s98
      %p112 = scmp.eq.s32.totalorder %s22, 1
      %p113 = por %p111, %p112
      %p115 = scmp.ne.s32.totalorder %s98, %s114
      %p116 = scmp.eq.s32.totalorder %s22, 0
      %p117 = por %p115, %p116
      %p118 = scmp.le.s32.totalorder 1, %s16
      %p119 = scmp.lt.s32.totalorder %s16, 3
      %p120 = pnand %p118, %p119
      %p121 = pneg %p120
      // Predicated region
      $region9: #{tpu_custom_call.1} parent=5 // pred_check
        _
      $region10: #{tpu_custom_call.1} parent=5 // pred_check_branch
        %123 = sbr.rel (%p120) target = $region12
      $region11: #{tpu_custom_call.1} parent=5 // pred_region
        %s124 = ssub.s32 %s16, 1
        // Predicated region
        $region13: #{tpu_custom_call.1} parent=11 // pred_check
          %p125 = pneg %p63
        $region14: #{tpu_custom_call.1} parent=11 // pred_check_branch
          %127 = sbr.rel (%p125) target = $region16
        $region15: #{tpu_custom_call.1} parent=11 // pred_region
          %s129 = ssub.s32 1024, 1024
          %130 = vsyncadd [#allocation6], %s129
          %s131 = sshll.u32 [#allocation5], 4
          %s132 = int_to_ptr.vmem [resolvable:$true] %s131
          %137 = dma.hbm_to_vmem [thread:$0]  %s1, 1024, %s132, [#allocation6], 64, 64, 4
        $region16: #{tpu_custom_call.1} parent=11 // pred_fallthru
          _
        // Predicated region
        $region17: #{tpu_custom_call.1} parent=11 // pred_check
          %p138 = pneg %p84
        $region18: #{tpu_custom_call.1} parent=11 // pred_check_branch
          %140 = sbr.rel (%p138) target = $region20
        $region19: #{tpu_custom_call.1} parent=11 // pred_region
          %s142 = ssub.s32 16, 16
          %143 = vsyncadd [#allocation6], %s142
          %s145 = sshll.u32 [#allocation7], 4
          %s146 = int_to_ptr.vmem [resolvable:$true] %s145
          %148 = dma.hbm_to_vmem [thread:$0]  %s2, 16, %s146, [#allocation6]
        $region20: #{tpu_custom_call.1} parent=11 // pred_fallthru
          _
      $region12: #{tpu_custom_call.1} parent=5 // pred_fallthru
        _
      %p149 = scmp.lt.s32.totalorder %s16, 2
      // Predicated region
      $region21: #{tpu_custom_call.1} parent=5 // pred_check
        %p150 = pneg %p149
      $region22: #{tpu_custom_call.1} parent=5 // pred_check_branch
        %152 = sbr.rel (%p150) target = $region24
      $region23: #{tpu_custom_call.1} parent=5 // pred_region
        // Predicated region
        $region25: #{tpu_custom_call.1} parent=23 // pred_check
          %p153 = pneg %p36
        $region26: #{tpu_custom_call.1} parent=23 // pred_check_branch
          %155 = sbr.rel (%p153) target = $region28
        $region27: #{tpu_custom_call.1} parent=23 // pred_region
          %s156 = sand.u32 %s26, 1
          %s157 = scalar_lea.sflag [#allocation3], %s156
          %s158 = sand.u32 %s26, 1
          %s159 = smul.addr %s158, 128
          %s160 = scalar_lea.vmem [#allocation2], %s159
          %s161 = smul.u32 32, %s16
          %s163 = ssub.s32 2048, 2048
          %164 = vsyncadd %s157, %s163
          %s165 = smul.addr %s161, 64
          %s166 = scalar_lea.hbm %s0, %s165
          %s167 = sshll.u32 %s160, 4
          %s168 = int_to_ptr.vmem [resolvable:$true] %s167
          %173 = dma.hbm_to_vmem [thread:$0]  %s166, 2048, %s168, %s157, 64, 64, 4
        $region28: #{tpu_custom_call.1} parent=23 // pred_fallthru
          _
      $region24: #{tpu_custom_call.1} parent=5 // pred_fallthru
        _
      %p174 = scmp.le.s32.totalorder 1, %s16
      %p175 = scmp.lt.s32.totalorder %s16, 3
      %p176 = pnand %p174, %p175
      %p177 = pneg %p176
      // Predicated region
      $region29: #{tpu_custom_call.1} parent=5 // pred_check
        _
      $region30: #{tpu_custom_call.1} parent=5 // pred_check_branch
        %179 = sbr.rel (%p176) target = $region32
      $region31: #{tpu_custom_call.1} parent=5 // pred_region
        %s180 = ssub.s32 %s16, 1
        %s181 = sand.u32 %s29, 1
        %s182 = scalar_lea.sflag [#allocation3], %s181
        %s183 = sand.u32 %s29, 1
        %s184 = smul.addr %s183, 128
        %s185 = scalar_lea.vmem [#allocation2], %s184
        // Predicated region
        $region33: #{tpu_custom_call.1} parent=31 // pred_check
          %p186 = pneg %p42
        $region34: #{tpu_custom_call.1} parent=31 // pred_check_branch
          %188 = sbr.rel (%p186) target = $region36
        $region35: #{tpu_custom_call.1} parent=31 // pred_region
          %189 = dma.done %s182, 2048
        $region36: #{tpu_custom_call.1} parent=31 // pred_fallthru
          _
        // Predicated region
        $region37: #{tpu_custom_call.1} parent=31 // pred_check
          %p190 = pneg %p63
        $region38: #{tpu_custom_call.1} parent=31 // pred_check_branch
          %192 = sbr.rel (%p190) target = $region40
        $region39: #{tpu_custom_call.1} parent=31 // pred_region
          %193 = dma.done [#allocation6], 1024
        $region40: #{tpu_custom_call.1} parent=31 // pred_fallthru
          _
        // Predicated region
        $region41: #{tpu_custom_call.1} parent=31 // pred_check
          %p194 = pneg %p84
        $region42: #{tpu_custom_call.1} parent=31 // pred_check_branch
          %196 = sbr.rel (%p194) target = $region44
        $region43: #{tpu_custom_call.1} parent=31 // pred_region
          %197 = dma.done [#allocation6], 16
        $region44: #{tpu_custom_call.1} parent=31 // pred_fallthru
          _
        %s198 = sand.u32 %s29, 1
        %s199 = scalar_lea.sflag [#allocation3], %s198
        %s200 = sand.u32 %s29, 1
        %s201 = smul.addr %s200, 128
        %s202 = scalar_lea.vmem [#allocation2], %s201
        %p203 = pneg %p42
        %p204 = pneg %p39
        %p205 = pneg %p63
        %p206 = pneg %p60
        %p207 = pneg %p84
        %p208 = pneg %p81
        %p209 = pneg %p110
        %p210 = pneg %p107
        %s211 = sand.u32 %s97, 1
        %s212 = scalar_lea.sflag [#allocation4], %s211
        %s213 = sand.u32 %s97, 1
        %s214 = smul.addr %s213, 256
        %s215 = scalar_lea.vmem [#allocation8], %s214
        %s216 = smul.u32 32, %s21
        %s217 = smul.u32 32, %s21
        %v219 = vld [vmem:[%s185] sm:$0xf]
        %v220 = vld [vmem:[%s185 + $0x4] sm:$0xf]
        %v221 = vld [vmem:[%s185 + $0x8] sm:$0xf]
        %v222 = vld [vmem:[%s185 + $0xc] sm:$0xf]
        %v223 = vld [vmem:[%s185 + $0x10] sm:$0xf]
        %v224 = vld [vmem:[%s185 + $0x14] sm:$0xf]
        %v225 = vld [vmem:[%s185 + $0x18] sm:$0xf]
        %v226 = vld [vmem:[%s185 + $0x1c] sm:$0xf]
        %v227 = vld [vmem:[%s185 + $0x20] sm:$0xf]
        %v228 = vld [vmem:[%s185 + $0x24] sm:$0xf]
        %v229 = vld [vmem:[%s185 + $0x28] sm:$0xf]
        %v230 = vld [vmem:[%s185 + $0x2c] sm:$0xf]
        %v231 = vld [vmem:[%s185 + $0x30] sm:$0xf]
        %v232 = vld [vmem:[%s185 + $0x34] sm:$0xf]
        %v233 = vld [vmem:[%s185 + $0x38] sm:$0xf]
        %v234 = vld [vmem:[%s185 + $0x3c] sm:$0xf]
        %v235 = vld [vmem:[%s185 + $0x40] sm:$0xf]
        %v236 = vld [vmem:[%s185 + $0x44] sm:$0xf]
        %v237 = vld [vmem:[%s185 + $0x48] sm:$0xf]
        %v238 = vld [vmem:[%s185 + $0x4c] sm:$0xf]
        %v239 = vld [vmem:[%s185 + $0x50] sm:$0xf]
        %v240 = vld [vmem:[%s185 + $0x54] sm:$0xf]
        %v241 = vld [vmem:[%s185 + $0x58] sm:$0xf]
        %v242 = vld [vmem:[%s185 + $0x5c] sm:$0xf]
        %v243 = vld [vmem:[%s185 + $0x60] sm:$0xf]
        %v244 = vld [vmem:[%s185 + $0x64] sm:$0xf]
        %v245 = vld [vmem:[%s185 + $0x68] sm:$0xf]
        %v246 = vld [vmem:[%s185 + $0x6c] sm:$0xf]
        %v247 = vld [vmem:[%s185 + $0x70] sm:$0xf]
        %v248 = vld [vmem:[%s185 + $0x74] sm:$0xf]
        %v249 = vld [vmem:[%s185 + $0x78] sm:$0xf]
        %v250 = vld [vmem:[%s185 + $0x7c] sm:$0xf]
        %v251 = vld [vmem:[#allocation5] sm:$0xf]
        %v252 = vld [vmem:[#allocation5 + $0x4] sm:$0xf]
        %v253 = vld [vmem:[#allocation5 + $0x8] sm:$0xf]
        %v254 = vld [vmem:[#allocation5 + $0xc] sm:$0xf]
        %v255 = vld [vmem:[#allocation5 + $0x10] sm:$0xf]
        %v256 = vld [vmem:[#allocation5 + $0x14] sm:$0xf]
        %v257 = vld [vmem:[#allocation5 + $0x18] sm:$0xf]
        %v258 = vld [vmem:[#allocation5 + $0x1c] sm:$0xf]
        %v259 = vld [vmem:[#allocation5 + $0x20] sm:$0xf]
        %v260 = vld [vmem:[#allocation5 + $0x24] sm:$0xf]
        %v261 = vld [vmem:[#allocation5 + $0x28] sm:$0xf]
        %v262 = vld [vmem:[#allocation5 + $0x2c] sm:$0xf]
        %v263 = vld [vmem:[#allocation5 + $0x30] sm:$0xf]
        %v264 = vld [vmem:[#allocation5 + $0x34] sm:$0xf]
        %v265 = vld [vmem:[#allocation5 + $0x38] sm:$0xf]
        %v266 = vld [vmem:[#allocation5 + $0x3c] sm:$0xf]
        %v267 = vld [vmem:[#allocation7] sm:$0x1]
        %v269 = vlaneseq
        %v270 = vshrl.u32 %v269, 7
        %v271 = vsub.s32 0, %v270
        %v272 = vrot.slane %v267, %v271
        %v306 = vunpack.c.l.b16 %v219
        %v307 = vunpack.c.l.b16 %v220
        %v308 = vunpack.c.l.b16 %v221
        %v309 = vunpack.c.l.b16 %v222
        %v310 = vunpack.c.l.b16 %v223
        %v311 = vunpack.c.l.b16 %v224
        %v312 = vunpack.c.l.b16 %v225
        %v313 = vunpack.c.l.b16 %v226
        %v314 = vunpack.c.l.b16 %v227
        %v315 = vunpack.c.l.b16 %v228
        %v316 = vunpack.c.l.b16 %v229
        %v317 = vunpack.c.l.b16 %v230
        %v318 = vunpack.c.l.b16 %v231
        %v319 = vunpack.c.l.b16 %v232
        %v320 = vunpack.c.l.b16 %v233
        %v321 = vunpack.c.l.b16 %v234
        %v322 = vunpack.c.l.b16 %v235
        %v323 = vunpack.c.l.b16 %v236
        %v324 = vunpack.c.l.b16 %v237
        %v325 = vunpack.c.l.b16 %v238
        %v326 = vunpack.c.l.b16 %v239
        %v327 = vunpack.c.l.b16 %v240
        %v328 = vunpack.c.l.b16 %v241
        %v329 = vunpack.c.l.b16 %v242
        %v330 = vunpack.c.l.b16 %v243
        %v331 = vunpack.c.l.b16 %v244
        %v332 = vunpack.c.l.b16 %v245
        %v333 = vunpack.c.l.b16 %v246
        %v334 = vunpack.c.l.b16 %v247
        %v335 = vunpack.c.l.b16 %v248
        %v336 = vunpack.c.l.b16 %v249
        %v337 = vunpack.c.l.b16 %v250
        %v338 = vpack.c.b16 %v307, %v306
        %v339 = vpack.c.b16 %v309, %v308
        %v340 = vpack.c.b16 %v311, %v310
        %v341 = vpack.c.b16 %v313, %v312
        %v342 = vpack.c.b16 %v315, %v314
        %v343 = vpack.c.b16 %v317, %v316
        %v344 = vpack.c.b16 %v319, %v318
        %v345 = vpack.c.b16 %v321, %v320
        %v346 = vpack.c.b16 %v323, %v322
        %v347 = vpack.c.b16 %v325, %v324
        %v348 = vpack.c.b16 %v327, %v326
        %v349 = vpack.c.b16 %v329, %v328
        %v350 = vpack.c.b16 %v331, %v330
        %v351 = vpack.c.b16 %v333, %v332
        %v352 = vpack.c.b16 %v335, %v334
        %v353 = vpack.c.b16 %v337, %v336
        %v386 = vunpack.c.l.b16 %v251
        %v387 = vunpack.c.l.b16 %v252
        %v388 = vunpack.c.l.b16 %v253
        %v389 = vunpack.c.l.b16 %v254
        %v390 = vunpack.c.l.b16 %v255
        %v391 = vunpack.c.l.b16 %v256
        %v392 = vunpack.c.l.b16 %v257
        %v393 = vunpack.c.l.b16 %v258
        %v394 = vunpack.c.l.b16 %v259
        %v395 = vunpack.c.l.b16 %v260
        %v396 = vunpack.c.l.b16 %v261
        %v397 = vunpack.c.l.b16 %v262
        %v398 = vunpack.c.l.b16 %v263
        %v399 = vunpack.c.l.b16 %v264
        %v400 = vunpack.c.l.b16 %v265
        %v401 = vunpack.c.l.b16 %v266
        %v402 = vpack.c.b16 %v387, %v386
        %v403 = vpack.c.b16 %v389, %v388
        %v404 = vpack.c.b16 %v391, %v390
        %v405 = vpack.c.b16 %v393, %v392
        %v406 = vpack.c.b16 %v395, %v394
        %v407 = vpack.c.b16 %v397, %v396
        %v408 = vpack.c.b16 %v399, %v398
        %v409 = vpack.c.b16 %v401, %v400
        %418 = vmatprep.subr.bf16.mxu0 0
        %419 = vmatpush1.bf16.msra.mxu0 %v402
        %420 = vmatprep.subr.bf16.mxu0 0
        %421 = vmatpush1.bf16.msra.mxu0 %v403
        %422 = vmatprep.subr.bf16.mxu0 0
        %423 = vmatpush1.bf16.msra.mxu0 %v404
        %424 = vmatprep.subr.bf16.mxu0 0
        %425 = vmatpush1.bf16.msra.mxu0 %v405
        %426 = vmatprep.subr.bf16.mxu0 0
        %427 = vmatpush1.bf16.msra.mxu0 %v406
        %428 = vmatprep.subr.bf16.mxu0 0
        %429 = vmatpush1.bf16.msra.mxu0 %v407
        %430 = vmatprep.subr.bf16.mxu0 0
        %431 = vmatpush1.bf16.msra.mxu0 %v408
        %432 = vmatprep.subr.bf16.mxu0 0
        %433 = vmatpush1.bf16.msra.mxu0 %v409
        %434 = vmatprep.subr.bf16.mxu0 0
        %435 = vmatpush1.bf16.msra.mxu0 0
        %436 = vmatprep.subr.bf16.mxu0 0
        %437 = vmatpush1.bf16.msra.mxu0 0
        %438 = vmatprep.subr.bf16.mxu0 0
        %439 = vmatpush1.bf16.msra.mxu0 0
        %440 = vmatprep.subr.bf16.mxu0 0
        %441 = vmatpush1.bf16.msra.mxu0 0
        %442 = vmatprep.subr.bf16.mxu0 0
        %443 = vmatpush1.bf16.msra.mxu0 0
        %444 = vmatprep.subr.bf16.mxu0 0
        %445 = vmatpush1.bf16.msra.mxu0 0
        %446 = vmatprep.subr.bf16.mxu0 0
        %447 = vmatpush1.bf16.msra.mxu0 0
        %448 = vmatprep.subr.bf16.mxu0 0
        %449 = vmatpush1.bf16.msra.mxu0 0
        %450 = vmatprep.mubr.bf16.mxu0 0
        %451 = vmatmul.mubr.bf16.gmra.mrb[0].mxu0 %v338
        %v452 = vpop.f32.mrb[0].mxu0
        %v453 = vadd.f32 %v272, %v452
        %v454 = vpop.f32.mrb[0].mxu0
        %v455 = vpop.f32.mrb[0].mxu0
        %v456 = vadd.f32 %v272, %v455
        %v457 = vpop.f32.mrb[0].mxu0
        %458 = vmatprep.mubr.bf16.mxu0 0
        %459 = vmatmul.mubr.bf16.gmra.mrb[0].mxu0 %v339
        %v460 = vpop.f32.mrb[0].mxu0
        %v461 = vadd.f32 %v272, %v460
        %v462 = vpop.f32.mrb[0].mxu0
        %v463 = vpop.f32.mrb[0].mxu0
        %v464 = vadd.f32 %v272, %v463
        %v465 = vpop.f32.mrb[0].mxu0
        %466 = vmatprep.mubr.bf16.mxu0 0
        %467 = vmatmul.mubr.bf16.gmra.mrb[0].mxu0 %v340
        %v468 = vpop.f32.mrb[0].mxu0
        %v469 = vadd.f32 %v272, %v468
        %v470 = vpop.f32.mrb[0].mxu0
        %v471 = vpop.f32.mrb[0].mxu0
        %v472 = vadd.f32 %v272, %v471
        %v473 = vpop.f32.mrb[0].mxu0
        %474 = vmatprep.mubr.bf16.mxu0 0
        %475 = vmatmul.mubr.bf16.gmra.mrb[0].mxu0 %v341
        %v476 = vpop.f32.mrb[0].mxu0
        %v477 = vadd.f32 %v272, %v476
        %v478 = vpop.f32.mrb[0].mxu0
        %v479 = vpop.f32.mrb[0].mxu0
        %v480 = vadd.f32 %v272, %v479
        %v481 = vpop.f32.mrb[0].mxu0
        %482 = vmatprep.mubr.bf16.mxu0 0
        %483 = vmatmul.mubr.bf16.gmra.mrb[0].mxu0 %v342
        %v484 = vpop.f32.mrb[0].mxu0
        %v485 = vadd.f32 %v272, %v484
        %v486 = vpop.f32.mrb[0].mxu0
        %v487 = vpop.f32.mrb[0].mxu0
        %v488 = vadd.f32 %v272, %v487
        %v489 = vpop.f32.mrb[0].mxu0
        %490 = vmatprep.mubr.bf16.mxu0 0
        %491 = vmatmul.mubr.bf16.gmra.mrb[0].mxu0 %v343
        %v492 = vpop.f32.mrb[0].mxu0
        %v493 = vadd.f32 %v272, %v492
        %v494 = vpop.f32.mrb[0].mxu0
        %v495 = vpop.f32.mrb[0].mxu0
        %v496 = vadd.f32 %v272, %v495
        %v497 = vpop.f32.mrb[0].mxu0
        %498 = vmatprep.mubr.bf16.mxu0 0
        %499 = vmatmul.mubr.bf16.gmra.mrb[0].mxu0 %v344
        %v500 = vpop.f32.mrb[0].mxu0
        %v501 = vadd.f32 %v272, %v500
        %v502 = vpop.f32.mrb[0].mxu0
        %v503 = vpop.f32.mrb[0].mxu0
        %v504 = vadd.f32 %v272, %v503
        %v505 = vpop.f32.mrb[0].mxu0
        %506 = vmatprep.mubr.bf16.mxu0 0
        %507 = vmatmul.mubr.bf16.gmra.mrb[0].mxu0 %v345
        %v508 = vpop.f32.mrb[0].mxu0
        %v509 = vadd.f32 %v272, %v508
        %v510 = vpop.f32.mrb[0].mxu0
        %v511 = vpop.f32.mrb[0].mxu0
        %v512 = vadd.f32 %v272, %v511
        %v513 = vpop.f32.mrb[0].mxu0
        %514 = vmatprep.mubr.bf16.mxu0 0
        %515 = vmatmul.mubr.bf16.gmra.mrb[0].mxu0 %v346
        %v516 = vpop.f32.mrb[0].mxu0
        %v517 = vadd.f32 %v272, %v516
        %v518 = vpop.f32.mrb[0].mxu0
        %v519 = vpop.f32.mrb[0].mxu0
        %v520 = vadd.f32 %v272, %v519
        %v521 = vpop.f32.mrb[0].mxu0
        %522 = vmatprep.mubr.bf16.mxu0 0
        %523 = vmatmul.mubr.bf16.gmra.mrb[0].mxu0 %v347
        %v524 = vpop.f32.mrb[0].mxu0
        %v525 = vadd.f32 %v272, %v524
        %v526 = vpop.f32.mrb[0].mxu0
        %v527 = vpop.f32.mrb[0].mxu0
        %v528 = vadd.f32 %v272, %v527
        %v529 = vpop.f32.mrb[0].mxu0
        %530 = vmatprep.mubr.bf16.mxu0 0
        %531 = vmatmul.mubr.bf16.gmra.mrb[0].mxu0 %v348
        %v532 = vpop.f32.mrb[0].mxu0
        %v533 = vadd.f32 %v272, %v532
        %v534 = vpop.f32.mrb[0].mxu0
        %v535 = vpop.f32.mrb[0].mxu0
        %v536 = vadd.f32 %v272, %v535
        %v537 = vpop.f32.mrb[0].mxu0
        %538 = vmatprep.mubr.bf16.mxu0 0
        %539 = vmatmul.mubr.bf16.gmra.mrb[0].mxu0 %v349
        %v540 = vpop.f32.mrb[0].mxu0
        %v541 = vadd.f32 %v272, %v540
        %v542 = vpop.f32.mrb[0].mxu0
        %v543 = vpop.f32.mrb[0].mxu0
        %v544 = vadd.f32 %v272, %v543
        %v545 = vpop.f32.mrb[0].mxu0
        %546 = vmatprep.mubr.bf16.mxu0 0
        %547 = vmatmul.mubr.bf16.gmra.mrb[0].mxu0 %v350
        %v548 = vpop.f32.mrb[0].mxu0
        %v549 = vadd.f32 %v272, %v548
        %v550 = vpop.f32.mrb[0].mxu0
        %v551 = vpop.f32.mrb[0].mxu0
        %v552 = vadd.f32 %v272, %v551
        %v553 = vpop.f32.mrb[0].mxu0
        %554 = vmatprep.mubr.bf16.mxu0 0
        %555 = vmatmul.mubr.bf16.gmra.mrb[0].mxu0 %v351
        %v556 = vpop.f32.mrb[0].mxu0
        %v557 = vadd.f32 %v272, %v556
        %v558 = vpop.f32.mrb[0].mxu0
        %v559 = vpop.f32.mrb[0].mxu0
        %v560 = vadd.f32 %v272, %v559
        %v561 = vpop.f32.mrb[0].mxu0
        %562 = vmatprep.mubr.bf16.mxu0 0
        %563 = vmatmul.mubr.bf16.gmra.mrb[0].mxu0 %v352
        %v564 = vpop.f32.mrb[0].mxu0
        %v565 = vadd.f32 %v272, %v564
        %v566 = vpop.f32.mrb[0].mxu0
        %v567 = vpop.f32.mrb[0].mxu0
        %v568 = vadd.f32 %v272, %v567
        %v569 = vpop.f32.mrb[0].mxu0
        %570 = vmatprep.mubr.bf16.mxu0 0
        %571 = vmatmul.mubr.bf16.gmra.mrb[0].mxu0 %v353
        %v572 = vpop.f32.mrb[0].mxu0
        %v573 = vadd.f32 %v272, %v572
        %v574 = vpop.f32.mrb[0].mxu0
        %v575 = vpop.f32.mrb[0].mxu0
        %v576 = vadd.f32 %v272, %v575
        %v577 = vpop.f32.mrb[0].mxu0
        %578 = vdwg.mxu0
        %v579 = vxor.u32 %v453, 2147483648
        %v580 = vxor.u32 %v456, 2147483648
        %v581 = vxor.u32 %v461, 2147483648
        %v582 = vxor.u32 %v464, 2147483648
        %v583 = vxor.u32 %v469, 2147483648
        %v584 = vxor.u32 %v472, 2147483648
        %v585 = vxor.u32 %v477, 2147483648
        %v586 = vxor.u32 %v480, 2147483648
        %v587 = vxor.u32 %v485, 2147483648
        %v588 = vxor.u32 %v488, 2147483648
        %v589 = vxor.u32 %v493, 2147483648
        %v590 = vxor.u32 %v496, 2147483648
        %v591 = vxor.u32 %v501, 2147483648
        %v592 = vxor.u32 %v504, 2147483648
        %v593 = vxor.u32 %v509, 2147483648
        %v594 = vxor.u32 %v512, 2147483648
        %v595 = vxor.u32 %v517, 2147483648
        %v596 = vxor.u32 %v520, 2147483648
        %v597 = vxor.u32 %v525, 2147483648
        %v598 = vxor.u32 %v528, 2147483648
        %v599 = vxor.u32 %v533, 2147483648
        %v600 = vxor.u32 %v536, 2147483648
        %v601 = vxor.u32 %v541, 2147483648
        %v602 = vxor.u32 %v544, 2147483648
        %v603 = vxor.u32 %v549, 2147483648
        %v604 = vxor.u32 %v552, 2147483648
        %v605 = vxor.u32 %v557, 2147483648
        %v606 = vxor.u32 %v560, 2147483648
        %v607 = vxor.u32 %v565, 2147483648
        %v608 = vxor.u32 %v568, 2147483648
        %v609 = vxor.u32 %v573, 2147483648
        %v610 = vxor.u32 %v576, 2147483648
        %v611 = vmul.f32 %v579, 1.442695
        %v612 = vpow.pop %v611
        %v613 = vmul.f32 %v580, 1.442695
        %v614 = vpow.pop %v613
        %v615 = vmul.f32 %v581, 1.442695
        %v616 = vpow.pop %v615
        %v617 = vmul.f32 %v582, 1.442695
        %v618 = vpow.pop %v617
        %v619 = vmul.f32 %v583, 1.442695
        %v620 = vpow.pop %v619
        %v621 = vmul.f32 %v584, 1.442695
        %v622 = vpow.pop %v621
        %v623 = vmul.f32 %v585, 1.442695
        %v624 = vpow.pop %v623
        %v625 = vmul.f32 %v586, 1.442695
        %v626 = vpow.pop %v625
        %v627 = vmul.f32 %v587, 1.442695
        %v628 = vpow.pop %v627
        %v629 = vmul.f32 %v588, 1.442695
        %v630 = vpow.pop %v629
        %v631 = vmul.f32 %v589, 1.442695
        %v632 = vpow.pop %v631
        %v633 = vmul.f32 %v590, 1.442695
        %v634 = vpow.pop %v633
        %v635 = vmul.f32 %v591, 1.442695
        %v636 = vpow.pop %v635
        %v637 = vmul.f32 %v592, 1.442695
        %v638 = vpow.pop %v637
        %v639 = vmul.f32 %v593, 1.442695
        %v640 = vpow.pop %v639
        %v641 = vmul.f32 %v594, 1.442695
        %v642 = vpow.pop %v641
        %v643 = vmul.f32 %v595, 1.442695
        %v644 = vpow.pop %v643
        %v645 = vmul.f32 %v596, 1.442695
        %v646 = vpow.pop %v645
        %v647 = vmul.f32 %v597, 1.442695
        %v648 = vpow.pop %v647
        %v649 = vmul.f32 %v598, 1.442695
        %v650 = vpow.pop %v649
        %v651 = vmul.f32 %v599, 1.442695
        %v652 = vpow.pop %v651
        %v653 = vmul.f32 %v600, 1.442695
        %v654 = vpow.pop %v653
        %v655 = vmul.f32 %v601, 1.442695
        %v656 = vpow.pop %v655
        %v657 = vmul.f32 %v602, 1.442695
        %v658 = vpow.pop %v657
        %v659 = vmul.f32 %v603, 1.442695
        %v660 = vpow.pop %v659
        %v661 = vmul.f32 %v604, 1.442695
        %v662 = vpow.pop %v661
        %v663 = vmul.f32 %v605, 1.442695
        %v664 = vpow.pop %v663
        %v665 = vmul.f32 %v606, 1.442695
        %v666 = vpow.pop %v665
        %v667 = vmul.f32 %v607, 1.442695
        %v668 = vpow.pop %v667
        %v669 = vmul.f32 %v608, 1.442695
        %v670 = vpow.pop %v669
        %v671 = vmul.f32 %v609, 1.442695
        %v672 = vpow.pop %v671
        %v673 = vmul.f32 %v610, 1.442695
        %v674 = vpow.pop %v673
        %v675 = vadd.f32 %v612, 1.0
        %v676 = vadd.f32 %v614, 1.0
        %v677 = vadd.f32 %v616, 1.0
        %v678 = vadd.f32 %v618, 1.0
        %v679 = vadd.f32 %v620, 1.0
        %v680 = vadd.f32 %v622, 1.0
        %v681 = vadd.f32 %v624, 1.0
        %v682 = vadd.f32 %v626, 1.0
        %v683 = vadd.f32 %v628, 1.0
        %v684 = vadd.f32 %v630, 1.0
        %v685 = vadd.f32 %v632, 1.0
        %v686 = vadd.f32 %v634, 1.0
        %v687 = vadd.f32 %v636, 1.0
        %v688 = vadd.f32 %v638, 1.0
        %v689 = vadd.f32 %v640, 1.0
        %v690 = vadd.f32 %v642, 1.0
        %v691 = vadd.f32 %v644, 1.0
        %v692 = vadd.f32 %v646, 1.0
        %v693 = vadd.f32 %v648, 1.0
        %v694 = vadd.f32 %v650, 1.0
        %v695 = vadd.f32 %v652, 1.0
        %v696 = vadd.f32 %v654, 1.0
        %v697 = vadd.f32 %v656, 1.0
        %v698 = vadd.f32 %v658, 1.0
        %v699 = vadd.f32 %v660, 1.0
        %v700 = vadd.f32 %v662, 1.0
        %v701 = vadd.f32 %v664, 1.0
        %v702 = vadd.f32 %v666, 1.0
        %v703 = vadd.f32 %v668, 1.0
        %v704 = vadd.f32 %v670, 1.0
        %v705 = vadd.f32 %v672, 1.0
        %v706 = vadd.f32 %v674, 1.0
        %v707 = vrcp.pop %v675
        %v708 = vmul.f32 1.0, %v707
        %v709 = vrcp.pop %v676
        %v710 = vmul.f32 1.0, %v709
        %v711 = vrcp.pop %v677
        %v712 = vmul.f32 1.0, %v711
        %v713 = vrcp.pop %v678
        %v714 = vmul.f32 1.0, %v713
        %v715 = vrcp.pop %v679
        %v716 = vmul.f32 1.0, %v715
        %v717 = vrcp.pop %v680
        %v718 = vmul.f32 1.0, %v717
        %v719 = vrcp.pop %v681
        %v720 = vmul.f32 1.0, %v719
        %v721 = vrcp.pop %v682
        %v722 = vmul.f32 1.0, %v721
        %v723 = vrcp.pop %v683
        %v724 = vmul.f32 1.0, %v723
        %v725 = vrcp.pop %v684
        %v726 = vmul.f32 1.0, %v725
        %v727 = vrcp.pop %v685
        %v728 = vmul.f32 1.0, %v727
        %v729 = vrcp.pop %v686
        %v730 = vmul.f32 1.0, %v729
        %v731 = vrcp.pop %v687
        %v732 = vmul.f32 1.0, %v731
        %v733 = vrcp.pop %v688
        %v734 = vmul.f32 1.0, %v733
        %v735 = vrcp.pop %v689
        %v736 = vmul.f32 1.0, %v735
        %v737 = vrcp.pop %v690
        %v738 = vmul.f32 1.0, %v737
        %v739 = vrcp.pop %v691
        %v740 = vmul.f32 1.0, %v739
        %v741 = vrcp.pop %v692
        %v742 = vmul.f32 1.0, %v741
        %v743 = vrcp.pop %v693
        %v744 = vmul.f32 1.0, %v743
        %v745 = vrcp.pop %v694
        %v746 = vmul.f32 1.0, %v745
        %v747 = vrcp.pop %v695
        %v748 = vmul.f32 1.0, %v747
        %v749 = vrcp.pop %v696
        %v750 = vmul.f32 1.0, %v749
        %v751 = vrcp.pop %v697
        %v752 = vmul.f32 1.0, %v751
        %v753 = vrcp.pop %v698
        %v754 = vmul.f32 1.0, %v753
        %v755 = vrcp.pop %v699
        %v756 = vmul.f32 1.0, %v755
        %v757 = vrcp.pop %v700
        %v758 = vmul.f32 1.0, %v757
        %v759 = vrcp.pop %v701
        %v760 = vmul.f32 1.0, %v759
        %v761 = vrcp.pop %v702
        %v762 = vmul.f32 1.0, %v761
        %v763 = vrcp.pop %v703
        %v764 = vmul.f32 1.0, %v763
        %v765 = vrcp.pop %v704
        %v766 = vmul.f32 1.0, %v765
        %v767 = vrcp.pop %v705
        %v768 = vmul.f32 1.0, %v767
        %v769 = vrcp.pop %v706
        %v770 = vmul.f32 1.0, %v769
        %v771 = vmul.f32 %v453, %v708
        %v772 = vmul.f32 %v456, %v710
        %v773 = vmul.f32 %v461, %v712
        %v774 = vmul.f32 %v464, %v714
        %v775 = vmul.f32 %v469, %v716
        %v776 = vmul.f32 %v472, %v718
        %v777 = vmul.f32 %v477, %v720
        %v778 = vmul.f32 %v480, %v722
        %v779 = vmul.f32 %v485, %v724
        %v780 = vmul.f32 %v488, %v726
        %v781 = vmul.f32 %v493, %v728
        %v782 = vmul.f32 %v496, %v730
        %v783 = vmul.f32 %v501, %v732
        %v784 = vmul.f32 %v504, %v734
        %v785 = vmul.f32 %v509, %v736
        %v786 = vmul.f32 %v512, %v738
        %v787 = vmul.f32 %v517, %v740
        %v788 = vmul.f32 %v520, %v742
        %v789 = vmul.f32 %v525, %v744
        %v790 = vmul.f32 %v528, %v746
        %v791 = vmul.f32 %v533, %v748
        %v792 = vmul.f32 %v536, %v750
        %v793 = vmul.f32 %v541, %v752
        %v794 = vmul.f32 %v544, %v754
        %v795 = vmul.f32 %v549, %v756
        %v796 = vmul.f32 %v552, %v758
        %v797 = vmul.f32 %v557, %v760
        %v798 = vmul.f32 %v560, %v762
        %v799 = vmul.f32 %v565, %v764
        %v800 = vmul.f32 %v568, %v766
        %v801 = vmul.f32 %v573, %v768
        %v802 = vmul.f32 %v576, %v770
        %803 = vst [vmem:[%s215] sm:$0xff] %v771
        %804 = vst [vmem:[%s215 + $0x8] sm:$0xff] %v772
        %805 = vst [vmem:[%s215 + $0x10] sm:$0xff] %v773
        %806 = vst [vmem:[%s215 + $0x18] sm:$0xff] %v774
        %807 = vst [vmem:[%s215 + $0x20] sm:$0xff] %v775
        %808 = vst [vmem:[%s215 + $0x28] sm:$0xff] %v776
        %809 = vst [vmem:[%s215 + $0x30] sm:$0xff] %v777
        %810 = vst [vmem:[%s215 + $0x38] sm:$0xff] %v778
        %811 = vst [vmem:[%s215 + $0x40] sm:$0xff] %v779
        %812 = vst [vmem:[%s215 + $0x48] sm:$0xff] %v780
        %813 = vst [vmem:[%s215 + $0x50] sm:$0xff] %v781
        %814 = vst [vmem:[%s215 + $0x58] sm:$0xff] %v782
        %815 = vst [vmem:[%s215 + $0x60] sm:$0xff] %v783
        %816 = vst [vmem:[%s215 + $0x68] sm:$0xff] %v784
        %817 = vst [vmem:[%s215 + $0x70] sm:$0xff] %v785
        %818 = vst [vmem:[%s215 + $0x78] sm:$0xff] %v786
        %819 = vst [vmem:[%s215 + $0x80] sm:$0xff] %v787
        %820 = vst [vmem:[%s215 + $0x88] sm:$0xff] %v788
        %821 = vst [vmem:[%s215 + $0x90] sm:$0xff] %v789
        %822 = vst [vmem:[%s215 + $0x98] sm:$0xff] %v790
        %823 = vst [vmem:[%s215 + $0xa0] sm:$0xff] %v791
        %824 = vst [vmem:[%s215 + $0xa8] sm:$0xff] %v792
        %825 = vst [vmem:[%s215 + $0xb0] sm:$0xff] %v793
        %826 = vst [vmem:[%s215 + $0xb8] sm:$0xff] %v794
        %827 = vst [vmem:[%s215 + $0xc0] sm:$0xff] %v795
        %828 = vst [vmem:[%s215 + $0xc8] sm:$0xff] %v796
        %829 = vst [vmem:[%s215 + $0xd0] sm:$0xff] %v797
        %830 = vst [vmem:[%s215 + $0xd8] sm:$0xff] %v798
        %831 = vst [vmem:[%s215 + $0xe0] sm:$0xff] %v799
        %832 = vst [vmem:[%s215 + $0xe8] sm:$0xff] %v800
        %833 = vst [vmem:[%s215 + $0xf0] sm:$0xff] %v801
        %834 = vst [vmem:[%s215 + $0xf8] sm:$0xff] %v802
        %s835 = sand.u32 %s97, 1
        %s836 = scalar_lea.sflag [#allocation4], %s835
        %s837 = sand.u32 %s97, 1
        %s838 = smul.addr %s837, 256
        %s839 = scalar_lea.vmem [#allocation8], %s838
        // Predicated region
        $region45: #{tpu_custom_call.1} parent=31 // pred_check
          %p840 = pneg %p107
        $region46: #{tpu_custom_call.1} parent=31 // pred_check_branch
          %842 = sbr.rel (%p840) target = $region48
        $region47: #{tpu_custom_call.1} parent=31 // pred_region
          %s843 = smul.u32 32, %s21
          %s845 = ssub.s32 4096, 4096
          %846 = vsyncadd %s836, %s845
          %s847 = smul.addr %s843, 128
          %s848 = scalar_lea.hbm %s3, %s847
          %s849 = sshll.u32 %s839, 4
          %s850 = int_to_ptr.vmem [resolvable:$true] %s849
          %855 = dma.vmem_to_hbm [thread:$0]  %s850, 4096, %s848, %s836, 128, 128, 8
        $region48: #{tpu_custom_call.1} parent=31 // pred_fallthru
          _
      $region32: #{tpu_custom_call.1} parent=5 // pred_fallthru
        _
      %p856 = scmp.le.s32.totalorder 2, %s16
      // Predicated region
      $region49: #{tpu_custom_call.1} parent=5 // pred_check
        %p857 = pneg %p856
      $region50: #{tpu_custom_call.1} parent=5 // pred_check_branch
        %859 = sbr.rel (%p857) target = $region52
      $region51: #{tpu_custom_call.1} parent=5 // pred_region
        %s860 = ssub.s32 %s16, 2
        // Predicated region
        $region53: #{tpu_custom_call.1} parent=51 // pred_check
          %p861 = pneg %p113
        $region54: #{tpu_custom_call.1} parent=51 // pred_check_branch
          %863 = sbr.rel (%p861) target = $region56
        $region55: #{tpu_custom_call.1} parent=51 // pred_region
          %s864 = sand.u32 %s98, 1
          %s865 = scalar_lea.sflag [#allocation4], %s864
          %s866 = sand.u32 %s98, 1
          %s867 = smul.addr %s866, 256
          %s868 = scalar_lea.vmem [#allocation8], %s867
          %869 = dma.done %s865, 4096
        $region56: #{tpu_custom_call.1} parent=51 // pred_fallthru
          _
      $region52: #{tpu_custom_call.1} parent=5 // pred_fallthru
        _
    $region6: #{tpu_custom_call.1} parent=1 // loop_footer
      %s20 = sadd.s32 1, %s16
    $region7: #{tpu_custom_call.1} parent=1 // loop_footer_branch
      %15 = sbr.rel target = $region3
    $region8: #{tpu_custom_call.1} parent=1 // loop_exit
      _
    %870 = vsyncpa [#allocation3], 1
    %s871 = scalar_lea.sflag [#allocation3], 1
    %872 = vsyncpa %s871, 1
    %873 = vsyncpa [#allocation6], 1
    %874 = vsyncpa [#allocation4], 1
    %s875 = scalar_lea.sflag [#allocation4], 1
    %876 = vsyncpa %s875, 1

</llo_original>
